<compile_context>
chip_gen: v5e
topology: v5e:2x2
jax: 0.10.0
libtpu: 0.0.40
codegen_flags: <defaults>
</compile_context>

<pallas_src>
import math

import jax
import jax.numpy as jnp
from jax.experimental import pallas as pl
from jax.experimental.pallas import tpu as pltpu

LANE = 128  # TPU lane width; all padded feature dims use this.


def _round_up(x, m):
    return (x + m - 1) // m * m


def actor_kernel(state_ref, w_ref, b_ref, out_ref):
    """Fused 3-layer MLP on lane-padded operands.

    state_ref : [Bt, sd_pad]            f32
    w_ref     : [sd_pad + 2*LANE, LANE] f32  (we | w1 | w2 stacked along rows)
    b_ref     : [3, LANE]               f32  (be ; b1 ; b2)
    out_ref   : [Bt, LANE]              f32  (valid action in first n_output lanes)
    """
    sd = state_ref.shape[-1]          # padded state dim (static, multiple of 8)
    lane = out_ref.shape[-1]          # 128

    x = state_ref[...]
    # Shared embedding: Linear + ReLU
    h = jnp.dot(x, w_ref[0:sd, :], preferred_element_type=jnp.float32)
    h = jnp.maximum(h + b_ref[0:1, :], 0.0)
    # _h1: Linear + ReLU
    h = jnp.dot(h, w_ref[sd:sd + lane, :], preferred_element_type=jnp.float32)
    h = jnp.maximum(h + b_ref[1:2, :], 0.0)
    # _h2: Linear
    a = jnp.dot(h, w_ref[sd + lane:sd + 2 * lane, :],
                preferred_element_type=jnp.float32)
    out_ref[...] = (a + b_ref[2:3, :]).astype(out_ref.dtype)


def pack_actor_params(we, be, w1, b1, w2, b2):
    """Pack the 3 weight matrices / 3 biases into two lane-dense VMEM slabs.

    Weights are stored transposed w.r.t. PyTorch, i.e. W has shape
    [in_features, out_features]; padded regions are zero so the padded matmuls
    are exact.
    """
    state_dim, emb_dim = we.shape
    n_features = w1.shape[1]
    n_output = w2.shape[1]
    sd_pad = _round_up(state_dim, 8)

    rows = sd_pad + 2 * LANE
    w_slab = jnp.zeros((rows, LANE), jnp.float32)
    w_slab = w_slab.at[0:state_dim, 0:emb_dim].set(we.astype(jnp.float32))
    w_slab = w_slab.at[sd_pad:sd_pad + emb_dim, 0:n_features].set(
        w1.astype(jnp.float32))
    off2 = sd_pad + LANE
    w_slab = w_slab.at[off2:off2 + n_features, 0:n_output].set(
        w2.astype(jnp.float32))

    b_slab = jnp.zeros((3, LANE), jnp.float32)
    b_slab = b_slab.at[0, 0:emb_dim].set(jnp.reshape(be, (-1,)).astype(jnp.float32))
    b_slab = b_slab.at[1, 0:n_features].set(jnp.reshape(b1, (-1,)).astype(jnp.float32))
    b_slab = b_slab.at[2, 0:n_output].set(jnp.reshape(b2, (-1,)).astype(jnp.float32))

    meta = dict(state_dim=state_dim, sd_pad=sd_pad, n_output=n_output)
    return w_slab, b_slab, meta


def actor_forward_packed(state, w_slab, b_slab, meta, *, batch_block=512):
    state = jnp.asarray(state, jnp.float32)
    B, state_dim = state.shape
    assert state_dim == meta["state_dim"]
    sd_pad = meta["sd_pad"]
    n_output = meta["n_output"]

    if B <= 4096:
        # Small/medium batch: single invocation, everything resident in VMEM,
        # no grid loop, no double buffering.
        Bp = _round_up(B, 8)
        xp = jnp.zeros((Bp, sd_pad), jnp.float32).at[:B, :state_dim].set(state)
        out = pl.pallas_call(
            actor_kernel,
            out_shape=jax.ShapeDtypeStruct((Bp, LANE), jnp.float32),
            in_specs=[
                pl.BlockSpec(memory_space=pltpu.MemorySpace.VMEM),
                pl.BlockSpec(memory_space=pltpu.MemorySpace.VMEM),
                pl.BlockSpec(memory_space=pltpu.MemorySpace.VMEM),
            ],
            out_specs=pl.BlockSpec(memory_space=pltpu.MemorySpace.VMEM),
        )(xp, w_slab, b_slab)
    else:
        # Large batch (RL training / batched inference): tile the batch axis so
        # the working set fits v7x's 64 MiB VMEM and the "parallel" axis shards
        # across its 2 TensorCores; weights stay fully resident per step.
        Bp = _round_up(B, batch_block)
        xp = jnp.zeros((Bp, sd_pad), jnp.float32).at[:B, :state_dim].set(state)
        grid = (Bp // batch_block,)
        out = pl.pallas_call(
            actor_kernel,
            out_shape=jax.ShapeDtypeStruct((Bp, LANE), jnp.float32),
            grid=grid,
            in_specs=[
                pl.BlockSpec((batch_block, sd_pad), lambda i: (i, 0)),
                pl.BlockSpec(w_slab.shape, lambda i: (0, 0)),
                pl.BlockSpec(b_slab.shape, lambda i: (0, 0)),
            ],
            out_specs=pl.BlockSpec((batch_block, LANE), lambda i: (i, 0)),
            compiler_params=pltpu.CompilerParams(
                dimension_semantics=("parallel",)),
        )(xp, w_slab, b_slab)

    a = out[:B, :n_output]
    # PyTorch `.squeeze()` removes all size-1 dims.
    return jnp.squeeze(a)


def actor_forward(state, we, be, w1, b1, w2, b2):
    w_slab, b_slab, meta = pack_actor_params(we, be, w1, b1, w2, b2)
    return actor_forward_packed(state, w_slab, b_slab, meta)


def xavier_uniform(key, fan_in, fan_out, gain):
    # Matches torch.nn.init.xavier_uniform_ (weight shape [out, in]); we build
    # the transposed [in, out] layout directly — bound is symmetric so this is
    # equivalent.
    bound = gain * math.sqrt(6.0 / (fan_in + fan_out))
    return jax.random.uniform(key, (fan_in, fan_out), jnp.float32, -bound, bound)


def linear_bias_default(key, fan_in, n_out):
    # PyTorch nn.Linear default bias init: U(-1/sqrt(fan_in), 1/sqrt(fan_in))
    bound = 1.0 / math.sqrt(fan_in)
    return jax.random.uniform(key, (1, n_out), jnp.float32, -bound, bound)


if __name__ == "__main__":
    # Shapes consistent with walker_stand: obs_dim=24, action_dim=6
    batch = 2
    state_dim = 24        # embedding input
    emb_dim = 32          # shared embedding output (== ActorNetwork input_shape[-1])
    n_features = 32
    n_output = 6

    key = jax.random.PRNGKey(0)
    ks = jax.random.split(key, 8)

    relu_gain = math.sqrt(2.0)   # nn.init.calculate_gain('relu')
    lin_gain = 1.0               # nn.init.calculate_gain('linear')

    # Shared embedding params (Linear + ReLU). Deterministic synthetic init.
    we = xavier_uniform(ks[0], state_dim, emb_dim, relu_gain)
    be = linear_bias_default(ks[1], state_dim, emb_dim)
    # _h1
    w1 = xavier_uniform(ks[2], emb_dim, n_features, relu_gain)
    b1 = linear_bias_default(ks[3], emb_dim, n_features)
    # _h2
    w2 = xavier_uniform(ks[4], n_features, n_output, lin_gain)
    b2 = linear_bias_default(ks[5], n_features, n_output)

    state = jax.random.normal(ks[6], (batch, state_dim), jnp.float32)

    # Pack weights once (reusable across calls), then run the kernel.
    w_slab, b_slab, meta = pack_actor_params(we, be, w1, b1, w2, b2)
    a = actor_forward_packed(state, w_slab, b_slab, meta)
    a = jax.block_until_ready(a)

    # Pure-JAX reference check
    h0 = jnp.maximum(state @ we + be, 0.0)
    h1 = jnp.maximum(h0 @ w1 + b1, 0.0)
    ref = jnp.squeeze(h1 @ w2 + b2)
    assert a.shape == ref.shape, (a.shape, ref.shape)
    assert jnp.allclose(a, ref, atol=1e-5, rtol=1e-5)

    print("KERNEL_OK")
</pallas_src>

<mosaic_0001>
module attributes {stable_mosaic.version = 11 : i64} {
  func.func @actor_kernel(%arg0: memref<8x24xf32, #tpu.memory_space<vmem>>, %arg1: memref<280x128xf32, #tpu.memory_space<vmem>>, %arg2: memref<3x128xf32, #tpu.memory_space<vmem>>, %arg3: memref<8x128xf32, #tpu.memory_space<vmem>>) attributes {dimension_semantics = [], scalar_prefetch = 0 : i64, scratch_operands = 0 : i64, tpu.core_type = #tpu.core_type<tc>} {
    %c0 = arith.constant 0 : index
    %c0_0 = arith.constant 0 : index
    %0 = vector.load %arg0[%c0, %c0_0] : memref<8x24xf32, #tpu.memory_space<vmem>>, vector<8x24xf32>
    %c0_1 = arith.constant 0 : index
    %c0_2 = arith.constant 0 : index
    %1 = vector.load %arg1[%c0_1, %c0_2] : memref<280x128xf32, #tpu.memory_space<vmem>>, vector<24x128xf32>
    %cst = arith.constant dense<0.000000e+00> : vector<8x128xf32>
    %2 = tpu.matmul %0, %1, %cst {dimension_numbers = #tpu.dot_dimension_numbers<[1], [0], [0], [1], [0, 0, 1, 1], [], []>} : vector<8x24xf32>, vector<24x128xf32>, vector<8x128xf32> -> vector<8x128xf32>
    %c0_3 = arith.constant 0 : index
    %c0_4 = arith.constant 0 : index
    %3 = vector.load %arg2[%c0_3, %c0_4] : memref<3x128xf32, #tpu.memory_space<vmem>>, vector<1x128xf32>
    %4 = vector.broadcast %3 : vector<1x128xf32> to vector<8x128xf32>
    %5 = arith.addf %2, %4 : vector<8x128xf32>
    %cst_5 = arith.constant 0.000000e+00 : f32
    %6 = vector.broadcast %cst_5 : f32 to vector<8x128xf32>
    %7 = arith.maximumf %5, %6 : vector<8x128xf32>
    %c24 = arith.constant 24 : index
    %c0_6 = arith.constant 0 : index
    %8 = vector.load %arg1[%c24, %c0_6] : memref<280x128xf32, #tpu.memory_space<vmem>>, vector<128x128xf32>
    %cst_7 = arith.constant dense<0.000000e+00> : vector<8x128xf32>
    %9 = tpu.matmul %7, %8, %cst_7 {dimension_numbers = #tpu.dot_dimension_numbers<[1], [0], [0], [1], [0, 0, 1, 1], [], []>} : vector<8x128xf32>, vector<128x128xf32>, vector<8x128xf32> -> vector<8x128xf32>
    %c1 = arith.constant 1 : index
    %c0_8 = arith.constant 0 : index
    %10 = vector.load %arg2[%c1, %c0_8] : memref<3x128xf32, #tpu.memory_space<vmem>>, vector<1x128xf32>
    %11 = vector.broadcast %10 : vector<1x128xf32> to vector<8x128xf32>
    %12 = arith.addf %9, %11 : vector<8x128xf32>
    %cst_9 = arith.constant 0.000000e+00 : f32
    %13 = vector.broadcast %cst_9 : f32 to vector<8x128xf32>
    %14 = arith.maximumf %12, %13 : vector<8x128xf32>
    %c152 = arith.constant 152 : index
    %c0_10 = arith.constant 0 : index
    %15 = vector.load %arg1[%c152, %c0_10] : memref<280x128xf32, #tpu.memory_space<vmem>>, vector<128x128xf32>
    %cst_11 = arith.constant dense<0.000000e+00> : vector<8x128xf32>
    %16 = tpu.matmul %14, %15, %cst_11 {dimension_numbers = #tpu.dot_dimension_numbers<[1], [0], [0], [1], [0, 0, 1, 1], [], []>} : vector<8x128xf32>, vector<128x128xf32>, vector<8x128xf32> -> vector<8x128xf32>
    %c2 = arith.constant 2 : index
    %c0_12 = arith.constant 0 : index
    %17 = vector.load %arg2[%c2, %c0_12] : memref<3x128xf32, #tpu.memory_space<vmem>>, vector<1x128xf32>
    %18 = vector.broadcast %17 : vector<1x128xf32> to vector<8x128xf32>
    %19 = arith.addf %16, %18 : vector<8x128xf32>
    %c0_13 = arith.constant 0 : index
    %c0_14 = arith.constant 0 : index
    %20 = vector.load %arg3[%c0_13, %c0_14] : memref<8x128xf32, #tpu.memory_space<vmem>>, vector<8x128xf32>
    tpu.vector_store %arg3[%c0_13, %c0_14], %19 {strides = array<i32>} : memref<8x128xf32, #tpu.memory_space<vmem>>, vector<8x128xf32>,
    return
  }
}

</mosaic_0001>

<llo_original>
// kernel: tpu_custom_call.1
$region0: #{tpu_custom_call.1}
  #allocation0 [shape = 'u32[]', space=smem, size = 0x4, offset = 0x4, fixed_abs, tag = 'smem constant byte address 0x4 - core index']
  #allocation1 [shape = 'u32[72,128]{1,0:T(1,128)}', space=vmem, size = 0x9000, scoped, tag = 'internal scratch']
  %s0 = inlined_call_operand.hbm [shape: f32[8,24], index: 0, kind: input, shape index: {}]
  %s1 = inlined_call_operand.hbm [shape: f32[280,128], index: 1, kind: input, shape index: {}]
  %s2 = inlined_call_operand.hbm [shape: f32[3,128], index: 2, kind: input, shape index: {}]
  %s3 = inlined_call_operand.hbm [shape: f32[8,128], index: 3, kind: output, shape index: {}]
  %s4 = sld [smem:[#allocation0]]
  $region34: #{tpu_custom_call.1} parent=0
    _
  %s6 = ssub.s32 1, %s4
  %s7 = scalar_select 0, %s6, %s4
  $region1: #{tpu_custom_call.1} parent=0
    #allocation2 [shape = 'u8[4096]{0}', space=vmem, size = 0x1000, scoped, tag = 'input window, operand 0, single buffered']
    #allocation3 [shape = 's32[1]{0}', space=sflag, size = 0x4, scoped, tag = 'scoped memory for tpu_custom_call.1']
    #allocation4 [shape = 's32[1]{0}', space=sflag, size = 0x4, scoped, tag = 'scoped memory for tpu_custom_call.1']
    #allocation5 [shape = 'u8[143360]{0}', space=vmem, size = 0x23000, scoped, tag = 'input window, operand 1, single buffered']
    #allocation6 [shape = 's32[1]{0}', space=sflag, size = 0x4, scoped, tag = 'scoped memory for tpu_custom_call.1']
    #allocation7 [shape = 'u8[2048]{0}', space=vmem, size = 0x800, scoped, tag = 'input window, operand 2, single buffered']
    #allocation8 [shape = 'u8[4096]{0}', space=vmem, size = 0x1000, scoped, tag = 'output window, operand 0, single buffered']
    %8 = vsyncpa [#allocation3], 0
    %9 = vsyncpa [#allocation6], 0
    %10 = vsyncpa [#allocation4], 0
    // Predicated region
    $region2: #{tpu_custom_call.1} parent=1 // pred_check
      _
    $region3: #{tpu_custom_call.1} parent=1 // pred_check_branch
      %12 = sbr.rel (0) target = $region5
    $region4: #{tpu_custom_call.1} parent=1 // pred_region
      %14 = vsyncadd [#allocation3], 0
      %s16 = sshll.u32 %s0, 4
      %s17 = int_to_ptr.hbm [resolvable:$true] %s16
      %s18 = sshll.u32 [#allocation2], 4
      %s19 = int_to_ptr.vmem [resolvable:$true] %s18
      %21 = dma.hbm_to_vmem [thread:$0]  %s17, 128, %s19, [#allocation3]
    $region5: #{tpu_custom_call.1} parent=1 // pred_fallthru
      _
    // Predicated region
    $region6: #{tpu_custom_call.1} parent=1 // pred_check
      _
    $region7: #{tpu_custom_call.1} parent=1 // pred_check_branch
      %23 = sbr.rel (0) target = $region9
    $region8: #{tpu_custom_call.1} parent=1 // pred_region
      %25 = vsyncadd [#allocation6], 0
      %s26 = sshll.u32 %s1, 4
      %s27 = int_to_ptr.hbm [resolvable:$true] %s26
      %s28 = sshll.u32 [#allocation5], 4
      %s29 = int_to_ptr.vmem [resolvable:$true] %s28
      %34 = dma.hbm_to_vmem [thread:$0]  %s27, 4480, %s29, [#allocation6], 128, 128, 8
    $region9: #{tpu_custom_call.1} parent=1 // pred_fallthru
      _
    // Predicated region
    $region10: #{tpu_custom_call.1} parent=1 // pred_check
      _
    $region11: #{tpu_custom_call.1} parent=1 // pred_check_branch
      %36 = sbr.rel (0) target = $region13
    $region12: #{tpu_custom_call.1} parent=1 // pred_region
      %38 = vsyncadd [#allocation6], 0
      %s40 = sshll.u32 %s2, 4
      %s41 = int_to_ptr.hbm [resolvable:$true] %s40
      %s42 = sshll.u32 [#allocation7], 4
      %s43 = int_to_ptr.vmem [resolvable:$true] %s42
      %45 = dma.hbm_to_vmem [thread:$0]  %s41, 64, %s43, [#allocation6]
    $region13: #{tpu_custom_call.1} parent=1 // pred_fallthru
      _
    // Predicated region
    $region14: #{tpu_custom_call.1} parent=1 // pred_check
      _
    $region15: #{tpu_custom_call.1} parent=1 // pred_check_branch
      %47 = sbr.rel (0) target = $region17
    $region16: #{tpu_custom_call.1} parent=1 // pred_region
      %49 = dma.done [#allocation3], 128
    $region17: #{tpu_custom_call.1} parent=1 // pred_fallthru
      _
    // Predicated region
    $region18: #{tpu_custom_call.1} parent=1 // pred_check
      _
    $region19: #{tpu_custom_call.1} parent=1 // pred_check_branch
      %51 = sbr.rel (0) target = $region21
    $region20: #{tpu_custom_call.1} parent=1 // pred_region
      %53 = dma.done [#allocation6], 4480
    $region21: #{tpu_custom_call.1} parent=1 // pred_fallthru
      _
    // Predicated region
    $region22: #{tpu_custom_call.1} parent=1 // pred_check
      _
    $region23: #{tpu_custom_call.1} parent=1 // pred_check_branch
      %55 = sbr.rel (0) target = $region25
    $region24: #{tpu_custom_call.1} parent=1 // pred_region
      %57 = dma.done [#allocation6], 64
    $region25: #{tpu_custom_call.1} parent=1 // pred_fallthru
      _
    %v58 = vld [vmem:[#allocation2] sm:$0xff]
    %v59 = vld [vmem:[#allocation5] sm:$0xff]
    %v60 = vld [vmem:[#allocation5 + $0x8] sm:$0xff]
    %v61 = vld [vmem:[#allocation5 + $0x10] sm:$0xff]
    %v62 = vld [vmem:[#allocation7] sm:$0x1]
    %v63 = vperm.slane %v62, 0
    %vm64 = vcmask 195584
    %v66 = vsel %vm64, %v58, 0
    %68 = vmatpush.msra.mxu0 0.0
    %69 = vmatpush.msra.mxu0 0.0
    %70 = vmatpush.msra.mxu0 0.0
    %71 = vmatpush.msra.mxu0 0.0
    %72 = vmatpush.msra.mxu0 0.0
    %73 = vmatpush.msra.mxu0 0.0
    %74 = vmatpush.msra.mxu0 0.0
    %75 = vmatpush.msra.mxu0 0.0
    %76 = vmatpush.msra.mxu0 0.0
    %77 = vmatpush.msra.mxu0 0.0
    %78 = vmatpush.msra.mxu0 0.0
    %79 = vmatpush.msra.mxu0 0.0
    %80 = vmatpush.msra.mxu0 0.0
    %81 = vmatpush.msra.mxu0 %v61
    %82 = vmatpush.msra.mxu0 %v60
    %83 = vmatpush.msra.mxu0 %v59
    %84 = vmatmul.f32.gmra.mxu0 %v66
    %v85 = vpop.f32.mrf.mxu0
    %v86 = vadd.f32 %v63, %v85
    %87 = vdwg.mxu0
    %v88 = vmax.f32 %v86, 0.0
    %v89 = vld [vmem:[#allocation5 + $0x18] sm:$0xff]
    %v90 = vld [vmem:[#allocation5 + $0x20] sm:$0xff]
    %v91 = vld [vmem:[#allocation5 + $0x28] sm:$0xff]
    %v92 = vld [vmem:[#allocation5 + $0x30] sm:$0xff]
    %v93 = vld [vmem:[#allocation5 + $0x38] sm:$0xff]
    %v94 = vld [vmem:[#allocation5 + $0x40] sm:$0xff]
    %v95 = vld [vmem:[#allocation5 + $0x48] sm:$0xff]
    %v96 = vld [vmem:[#allocation5 + $0x50] sm:$0xff]
    %v97 = vld [vmem:[#allocation5 + $0x58] sm:$0xff]
    %v98 = vld [vmem:[#allocation5 + $0x60] sm:$0xff]
    %v99 = vld [vmem:[#allocation5 + $0x68] sm:$0xff]
    %v100 = vld [vmem:[#allocation5 + $0x70] sm:$0xff]
    %v101 = vld [vmem:[#allocation5 + $0x78] sm:$0xff]
    %v102 = vld [vmem:[#allocation5 + $0x80] sm:$0xff]
    %v103 = vld [vmem:[#allocation5 + $0x88] sm:$0xff]
    %v104 = vld [vmem:[#allocation5 + $0x90] sm:$0xff]
    %v105 = vld [vmem:[#allocation7 + $0x1] sm:$0x1]
    %v106 = vperm.slane %v105, 0
    %107 = vmatpush.msra.mxu0 %v104
    %108 = vmatpush.msra.mxu0 %v103
    %109 = vmatpush.msra.mxu0 %v102
    %110 = vmatpush.msra.mxu0 %v101
    %111 = vmatpush.msra.mxu0 %v100
    %112 = vmatpush.msra.mxu0 %v99
    %113 = vmatpush.msra.mxu0 %v98
    %114 = vmatpush.msra.mxu0 %v97
    %115 = vmatpush.msra.mxu0 %v96
    %116 = vmatpush.msra.mxu0 %v95
    %117 = vmatpush.msra.mxu0 %v94
    %118 = vmatpush.msra.mxu0 %v93
    %119 = vmatpush.msra.mxu0 %v92
    %120 = vmatpush.msra.mxu0 %v91
    %121 = vmatpush.msra.mxu0 %v90
    %122 = vmatpush.msra.mxu0 %v89
    %123 = vmatmul.f32.gmra.mxu0 %v88
    %v124 = vpop.f32.mrf.mxu0
    %v125 = vadd.f32 %v106, %v124
    %126 = vdwg.mxu0
    %v127 = vmax.f32 %v125, 0.0
    %v128 = vld [vmem:[#allocation5 + $0x98] sm:$0xff]
    %v129 = vld [vmem:[#allocation5 + $0xa0] sm:$0xff]
    %v130 = vld [vmem:[#allocation5 + $0xa8] sm:$0xff]
    %v131 = vld [vmem:[#allocation5 + $0xb0] sm:$0xff]
    %v132 = vld [vmem:[#allocation5 + $0xb8] sm:$0xff]
    %v133 = vld [vmem:[#allocation5 + $0xc0] sm:$0xff]
    %v134 = vld [vmem:[#allocation5 + $0xc8] sm:$0xff]
    %v135 = vld [vmem:[#allocation5 + $0xd0] sm:$0xff]
    %v136 = vld [vmem:[#allocation5 + $0xd8] sm:$0xff]
    %v137 = vld [vmem:[#allocation5 + $0xe0] sm:$0xff]
    %v138 = vld [vmem:[#allocation5 + $0xe8] sm:$0xff]
    %v139 = vld [vmem:[#allocation5 + $0xf0] sm:$0xff]
    %v140 = vld [vmem:[#allocation5 + $0xf8] sm:$0xff]
    %v141 = vld [vmem:[#allocation5 + $0x100] sm:$0xff]
    %v142 = vld [vmem:[#allocation5 + $0x108] sm:$0xff]
    %v143 = vld [vmem:[#allocation5 + $0x110] sm:$0xff]
    %v144 = vld [vmem:[#allocation7 + $0x2] sm:$0x1]
    %v145 = vperm.slane %v144, 0
    %146 = vmatpush.msra.mxu0 %v143
    %147 = vmatpush.msra.mxu0 %v142
    %148 = vmatpush.msra.mxu0 %v141
    %149 = vmatpush.msra.mxu0 %v140
    %150 = vmatpush.msra.mxu0 %v139
    %151 = vmatpush.msra.mxu0 %v138
    %152 = vmatpush.msra.mxu0 %v137
    %153 = vmatpush.msra.mxu0 %v136
    %154 = vmatpush.msra.mxu0 %v135
    %155 = vmatpush.msra.mxu0 %v134
    %156 = vmatpush.msra.mxu0 %v133
    %157 = vmatpush.msra.mxu0 %v132
    %158 = vmatpush.msra.mxu0 %v131
    %159 = vmatpush.msra.mxu0 %v130
    %160 = vmatpush.msra.mxu0 %v129
    %161 = vmatpush.msra.mxu0 %v128
    %162 = vmatmul.f32.gmra.mxu0 %v127
    %v163 = vpop.f32.mrf.mxu0
    %v164 = vadd.f32 %v145, %v163
    %165 = vdwg.mxu0
    %166 = vst [vmem:[#allocation8] sm:$0xff] %v164
    // Predicated region
    $region26: #{tpu_custom_call.1} parent=1 // pred_check
      _
    $region27: #{tpu_custom_call.1} parent=1 // pred_check_branch
      %168 = sbr.rel (0) target = $region29
    $region28: #{tpu_custom_call.1} parent=1 // pred_region
      %170 = vsyncadd [#allocation4], 0
      %s172 = sshll.u32 [#allocation8], 4
      %s173 = int_to_ptr.vmem [resolvable:$true] %s172
      %s174 = sshll.u32 %s3, 4
      %s175 = int_to_ptr.hbm [resolvable:$true] %s174
      %177 = dma.vmem_to_hbm [thread:$0]  %s173, 128, %s175, [#allocation4]
    $region29: #{tpu_custom_call.1} parent=1 // pred_fallthru
      _
    // Predicated region
    $region30: #{tpu_custom_call.1} parent=1 // pred_check
      _
    $region31: #{tpu_custom_call.1} parent=1 // pred_check_branch
      %179 = sbr.rel (0) target = $region33
    $region32: #{tpu_custom_call.1} parent=1 // pred_region
      %181 = dma.done [#allocation4], 128
    $region33: #{tpu_custom_call.1} parent=1 // pred_fallthru
      _
    %182 = vsyncpa [#allocation3], 1
    %183 = vsyncpa [#allocation6], 1
    %184 = vsyncpa [#allocation4], 1

</llo_original>
